<compile_context>
chip_gen: v7x
topology: tpu7x:2x2x1
jax: 0.10.0
libtpu: 0.0.40
codegen_flags: <defaults>
</compile_context>

<pallas_src>
import jax
import jax.numpy as jnp
from jax.experimental import pallas as pl
from jax.experimental.pallas import tpu as pltpu

N_DIM = 64
N_HEADS = 8
HEAD_DIM = N_DIM // N_HEADS
VOCAB_SIZE = 1000
MAX_LEN = 100
LN_EPS = 1e-5


def transformer_block_kernel(x_ref, wqkv_ref, wo_ref, bo_ref, gamma_ref,
                             beta_ref, mask_ref, y_ref, w_ref):
    # x_ref:    (BT, S, D)   f32  -- BT batch elements, embedded + pos-encoded
    # wqkv_ref: (D, 3D)      bf16 -- [Wq.T * head_dim**-0.5 | Wk.T | Wv.T]
    # wo_ref:   (D, D)       bf16 -- Wo.T
    # bo/gamma/beta: (1, D)  f32
    # mask_ref: (H*S, D)     bf16 -- block-diag head mask: [h*S+j, c] = (c//hd == h)
    # y_ref:    (BT, S, D)   f32  -- LayerNorm(attn_out + x)
    # w_ref:    (BT, S, H*S) f32  -- attention weights, flat lane-dense layout
    bt, seq, d = x_ref.shape
    rows = bt * seq

    x = x_ref[...]                                    # (bt, seq, d) f32
    x2 = x.reshape(rows, d)                           # collapse leading dims (free)

    # ---- fused QKV projection: one MXU matmul, bf16 inputs / f32 accumulation ----
    qkv = jnp.dot(x2.astype(jnp.bfloat16), wqkv_ref[...],
                  preferred_element_type=jnp.float32)            # (rows, 3d)
    q = qkv[:, 0 * d:1 * d].reshape(bt, seq, d)
    k = qkv[:, 1 * d:2 * d].reshape(bt, seq, d)
    v = qkv[:, 2 * d:3 * d].reshape(bt, seq, d)

    mask = mask_ref[...]                              # (H*seq, d) bf16, exact 0/1

    # ---- scores for ALL heads with one lane-dense batched matmul ----
    # k_bd[b, h*seq + j, c] = k[b, j, c] * (c // HEAD_DIM == h)
    k_rep = jnp.concatenate([k.astype(jnp.bfloat16)] * N_HEADS, axis=1)
    k_bd = k_rep * mask                               # (bt, H*seq, d) bf16
    scores = jnp.einsum("bqd,bnd->bqn", q.astype(jnp.bfloat16), k_bd,
                        preferred_element_type=jnp.float32)      # (bt, seq, H*seq)

    # ---- softmax over the HEAD axis: heads sit at stride `seq` along lanes ----
    # (per-group max / sum done with cheap strided lane slices; exact f32 divide
    #  kept so sum-over-heads stays == 1 to ~1e-7)
    gmax = scores[:, :, 0:seq]
    for h in range(1, N_HEADS):
        gmax = jnp.maximum(gmax, scores[:, :, h * seq:(h + 1) * seq])
    gmax_full = jnp.concatenate([gmax] * N_HEADS, axis=2)        # (bt, seq, H*seq)
    e = jnp.exp(scores - gmax_full)
    den = e[:, :, 0:seq]
    for h in range(1, N_HEADS):
        den = den + e[:, :, h * seq:(h + 1) * seq]
    den_full = jnp.concatenate([den] * N_HEADS, axis=2)
    w_flat = e / den_full                                        # (bt, seq, H*seq) f32
    w_ref[...] = w_flat                                          # single lane-dense store

    # ---- attn_out = weights @ v for all heads in one batched matmul ----
    v_rep = jnp.concatenate([v.astype(jnp.bfloat16)] * N_HEADS, axis=1)
    v_bd = v_rep * mask                                          # (bt, H*seq, d)
    attn = jnp.einsum("bqn,bnd->bqd", w_flat.astype(jnp.bfloat16), v_bd,
                      preferred_element_type=jnp.float32)        # (bt, seq, d)

    # ---- output projection (+bias) + residual + LayerNorm (f32) ----
    out = jnp.dot(attn.reshape(rows, d).astype(jnp.bfloat16), wo_ref[...],
                  preferred_element_type=jnp.float32) + bo_ref[...]
    y = out + x2
    mean = jnp.mean(y, axis=-1, keepdims=True)
    var = jnp.mean((y - mean) ** 2, axis=-1, keepdims=True)
    y_norm = (y - mean) * jax.lax.rsqrt(var + LN_EPS)
    y_ref[...] = (y_norm * gamma_ref[...] + beta_ref[...]).reshape(bt, seq, d)


def make_positional_encoding(max_len, n_dim):
    position = jnp.arange(max_len, dtype=jnp.float32)[:, None]          # (L, 1)
    div_term = jnp.exp(jnp.arange(0, n_dim, 2, dtype=jnp.float32)
                       * (-jnp.log(10000.0) / n_dim))                   # (D/2,)
    pe_even = jnp.sin(position * div_term)                              # (L, D/2)
    pe_odd = jnp.cos(position * div_term)                               # (L, D/2)
    pe = jnp.stack([pe_even, pe_odd], axis=-1).reshape(max_len, n_dim)  # interleave
    return pe


def init_params(key):
    ks = jax.random.split(key, 6)
    p = {}
    p["embedding"] = jax.random.normal(ks[0], (VOCAB_SIZE, N_DIM), jnp.float32)
    wq = jax.random.normal(ks[1], (N_DIM, N_DIM), jnp.float32) * 0.1
    wk = jax.random.normal(ks[2], (N_DIM, N_DIM), jnp.float32) * 0.1
    wv = jax.random.normal(ks[3], (N_DIM, N_DIM), jnp.float32) * 0.1
    wo = jax.random.normal(ks[4], (N_DIM, N_DIM), jnp.float32) * 0.1
    # nn.Linear computes x @ W.T; fuse Q|K|V into one (D, 3D) weight, fold the
    # 1/sqrt(head_dim) score scale into the Q columns, cast to bf16 for the MXU.
    scale = HEAD_DIM ** -0.5
    w_qkv_t = jnp.concatenate([wq.T * scale, wk.T, wv.T], axis=1)       # (D, 3D)
    p["w_qkv_t"] = w_qkv_t.astype(jnp.bfloat16)
    p["wo_t"] = wo.T.astype(jnp.bfloat16)
    p["bo"] = (jax.random.normal(ks[5], (N_DIM,), jnp.float32) * 0.1).reshape(1, N_DIM)
    p["gamma"] = jnp.ones((1, N_DIM), jnp.float32)    # nn.LayerNorm default init
    p["beta"] = jnp.zeros((1, N_DIM), jnp.float32)
    p["pe"] = make_positional_encoding(MAX_LEN, N_DIM)
    return p


def _pick_batch_tile(batch, seq):
    # Fold batch into each block (amortize per-step pipeline overhead, raise M
    # for the matmuls) while keeping >= 2 grid steps when possible so both v7x
    # TensorCores receive work.  Cap at ~256 rows per step (VMEM headroom).
    bt = max(1, min(batch, 256 // max(seq, 1)))
    if batch > 1:
        bt = max(1, min(bt, batch // 2))
    while batch % bt:
        bt -= 1
    return bt


def transformer_block(tokens, params):
    # glue (XLA): embedding gather + positional-encoding add
    B, S = tokens.shape
    x = params["embedding"][tokens] + params["pe"][:S][None, :, :]   # (B, S, D) f32

    BT = _pick_batch_tile(B, S)
    grid = (B // BT,)
    HS = N_HEADS * S

    # block-diagonal head mask, shared by K and V: [h*S+j, c] = (c//HEAD_DIM == h)
    n_idx = jnp.arange(HS, dtype=jnp.int32)
    c_idx = jnp.arange(N_DIM, dtype=jnp.int32)
    head_mask = (n_idx[:, None] // S == c_idx[None, :] // HEAD_DIM)
    head_mask = head_mask.astype(jnp.bfloat16)                       # (HS, D)

    in_specs = [
        pl.BlockSpec((BT, S, N_DIM), lambda b: (b, 0, 0)),       # x
        pl.BlockSpec((N_DIM, 3 * N_DIM), lambda b: (0, 0)),      # fused Wqkv.T (bf16)
        pl.BlockSpec((N_DIM, N_DIM), lambda b: (0, 0)),          # Wo.T (bf16)
        pl.BlockSpec((1, N_DIM), lambda b: (0, 0)),              # bo
        pl.BlockSpec((1, N_DIM), lambda b: (0, 0)),              # gamma
        pl.BlockSpec((1, N_DIM), lambda b: (0, 0)),              # beta
        pl.BlockSpec((HS, N_DIM), lambda b: (0, 0)),             # head mask
    ]
    out_specs = [
        pl.BlockSpec((BT, S, N_DIM), lambda b: (b, 0, 0)),       # y
        pl.BlockSpec((BT, S, HS), lambda b: (b, 0, 0)),          # weights (lane-dense flat)
    ]
    out_shape = [
        jax.ShapeDtypeStruct((B, S, N_DIM), jnp.float32),
        jax.ShapeDtypeStruct((B, S, HS), jnp.float32),
    ]

    y, w_flat = pl.pallas_call(
        transformer_block_kernel,
        grid=grid,
        in_specs=in_specs,
        out_specs=out_specs,
        out_shape=out_shape,
        compiler_params=pltpu.CompilerParams(
            dimension_semantics=("parallel",)),
    )(x, params["w_qkv_t"], params["wo_t"], params["bo"],
      params["gamma"], params["beta"], head_mask)

    # flat (B, S, H*S) -> torch layout (B, H, S, S): weights[b,h,i,j] = w_flat[b,i,h*S+j]
    weights = w_flat.reshape(B, S, N_HEADS, S).transpose(0, 2, 1, 3)
    return y, weights


if __name__ == "__main__":
    key = jax.random.PRNGKey(0)
    pkey, tkey = jax.random.split(key)
    params = init_params(pkey)

    B, S = 2, 8
    tokens = jax.random.randint(tkey, (B, S), 0, VOCAB_SIZE, dtype=jnp.int32)

    y, weights = transformer_block(tokens, params)
    jax.block_until_ready((y, weights))

    assert y.shape == (B, S, N_DIM) and y.dtype == jnp.float32
    assert weights.shape == (B, N_HEADS, S, S) and weights.dtype == jnp.float32
    # softmax over the head axis must sum to 1
    assert jnp.allclose(jnp.sum(weights, axis=1), 1.0, atol=1e-5)
    assert bool(jnp.all(jnp.isfinite(y)))

    print("KERNEL_OK")
</pallas_src>

<mosaic_0001>
module attributes {stable_mosaic.version = 11 : i64} {
  func.func @transformer_block_kernel(%arg0: i32, %arg1: memref<1x8x64xf32, #tpu.memory_space<vmem>>, %arg2: memref<64x192xbf16, #tpu.memory_space<vmem>>, %arg3: memref<64x64xbf16, #tpu.memory_space<vmem>>, %arg4: memref<1x64xf32, #tpu.memory_space<vmem>>, %arg5: memref<1x64xf32, #tpu.memory_space<vmem>>, %arg6: memref<1x64xf32, #tpu.memory_space<vmem>>, %arg7: memref<64x64xbf16, #tpu.memory_space<vmem>>, %arg8: memref<1x8x64xf32, #tpu.memory_space<vmem>>, %arg9: memref<1x8x64xf32, #tpu.memory_space<vmem>>) attributes {dimension_semantics = [#tpu.dimension_semantics<parallel>], iteration_bounds = array<i64: 2>, scalar_prefetch = 0 : i64, scratch_operands = 0 : i64, tpu.core_type = #tpu.core_type<tc>, window_params = [{transform_indices = @transform_0, window_bounds = array<i64: 1, 8, 64>}, {pipeline_mode = #tpu.pipeline_mode<synchronous>, transform_indices = @transform_1, window_bounds = array<i64: 64, 192>}, {pipeline_mode = #tpu.pipeline_mode<synchronous>, transform_indices = @transform_2, window_bounds = array<i64: 64, 64>}, {pipeline_mode = #tpu.pipeline_mode<synchronous>, transform_indices = @transform_3, window_bounds = array<i64: 1, 64>}, {pipeline_mode = #tpu.pipeline_mode<synchronous>, transform_indices = @transform_4, window_bounds = array<i64: 1, 64>}, {pipeline_mode = #tpu.pipeline_mode<synchronous>, transform_indices = @transform_5, window_bounds = array<i64: 1, 64>}, {pipeline_mode = #tpu.pipeline_mode<synchronous>, transform_indices = @transform_6, window_bounds = array<i64: 64, 64>}, {transform_indices = @transform_7, window_bounds = array<i64: 1, 8, 64>}, {transform_indices = @transform_8, window_bounds = array<i64: 1, 8, 64>}]} {
    %c0 = arith.constant 0 : index
    %c0_0 = arith.constant 0 : index
    %c0_1 = arith.constant 0 : index
    %0 = vector.load %arg1[%c0, %c0_0, %c0_1] : memref<1x8x64xf32, #tpu.memory_space<vmem>>, vector<1x8x64xf32>
    %1 = vector.shape_cast %0 : vector<1x8x64xf32> to vector<8x64xf32>
    %2 = arith.truncf %1 : vector<8x64xf32> to vector<8x64xbf16>
    %c0_2 = arith.constant 0 : index
    %c0_3 = arith.constant 0 : index
    %3 = vector.load %arg2[%c0_2, %c0_3] : memref<64x192xbf16, #tpu.memory_space<vmem>>, vector<64x192xbf16>
    %cst = arith.constant dense<0.000000e+00> : vector<8x192xf32>
    %4 = tpu.matmul %2, %3, %cst {dimension_numbers = #tpu.dot_dimension_numbers<[1], [0], [0], [1], [0, 0, 1, 1], [], []>} : vector<8x64xbf16>, vector<64x192xbf16>, vector<8x192xf32> -> vector<8x192xf32>
    %5 = vector.extract_strided_slice %4 {offsets = [0, 0], sizes = [8, 64], strides = [1, 1]} : vector<8x192xf32> to vector<8x64xf32>
    %6 = vector.shape_cast %5 : vector<8x64xf32> to vector<1x8x64xf32>
    %7 = vector.extract_strided_slice %4 {offsets = [0, 64], sizes = [8, 64], strides = [1, 1]} : vector<8x192xf32> to vector<8x64xf32>
    %8 = vector.shape_cast %7 : vector<8x64xf32> to vector<1x8x64xf32>
    %9 = vector.extract_strided_slice %4 {offsets = [0, 128], sizes = [8, 64], strides = [1, 1]} : vector<8x192xf32> to vector<8x64xf32>
    %10 = vector.shape_cast %9 : vector<8x64xf32> to vector<1x8x64xf32>
    %c0_4 = arith.constant 0 : index
    %c0_5 = arith.constant 0 : index
    %11 = vector.load %arg7[%c0_4, %c0_5] : memref<64x64xbf16, #tpu.memory_space<vmem>>, vector<64x64xbf16>
    %12 = arith.truncf %8 : vector<1x8x64xf32> to vector<1x8x64xbf16>
    %13 = tpu.concatenate %12, %12, %12, %12, %12, %12, %12, %12 in 1 : vector<1x8x64xbf16>, vector<1x8x64xbf16>, vector<1x8x64xbf16>, vector<1x8x64xbf16>, vector<1x8x64xbf16>, vector<1x8x64xbf16>, vector<1x8x64xbf16>, vector<1x8x64xbf16> -> vector<1x64x64xbf16>
    %14 = vector.shape_cast %11 : vector<64x64xbf16> to vector<1x64x64xbf16>
    %15 = arith.mulf %13, %14 : vector<1x64x64xbf16>
    %16 = arith.truncf %6 : vector<1x8x64xf32> to vector<1x8x64xbf16>
    "tpu.trace_start"() <{level = 10 : i32, message = "bqd,bnd->bqn"}> : () -> ()
    %cst_6 = arith.constant dense<0.000000e+00> : vector<1x8x64xf32>
    %17 = tpu.matmul %16, %15, %cst_6 {dimension_numbers = #tpu.dot_dimension_numbers<[2], [2], [1], [1], [0, 0, 0, 1, 1, 1], [0], [0]>} : vector<1x8x64xbf16>, vector<1x64x64xbf16>, vector<1x8x64xf32> -> vector<1x8x64xf32>
    "tpu.trace_stop"() : () -> ()
    %18 = vector.extract_strided_slice %17 {offsets = [0, 0, 0], sizes = [1, 8, 8], strides = [1, 1, 1]} : vector<1x8x64xf32> to vector<1x8x8xf32>
    %19 = vector.extract_strided_slice %17 {offsets = [0, 0, 8], sizes = [1, 8, 8], strides = [1, 1, 1]} : vector<1x8x64xf32> to vector<1x8x8xf32>
    %20 = arith.maximumf %18, %19 : vector<1x8x8xf32>
    %21 = vector.extract_strided_slice %17 {offsets = [0, 0, 16], sizes = [1, 8, 8], strides = [1, 1, 1]} : vector<1x8x64xf32> to vector<1x8x8xf32>
    %22 = arith.maximumf %20, %21 : vector<1x8x8xf32>
    %23 = vector.extract_strided_slice %17 {offsets = [0, 0, 24], sizes = [1, 8, 8], strides = [1, 1, 1]} : vector<1x8x64xf32> to vector<1x8x8xf32>
    %24 = arith.maximumf %22, %23 : vector<1x8x8xf32>
    %25 = vector.extract_strided_slice %17 {offsets = [0, 0, 32], sizes = [1, 8, 8], strides = [1, 1, 1]} : vector<1x8x64xf32> to vector<1x8x8xf32>
    %26 = arith.maximumf %24, %25 : vector<1x8x8xf32>
    %27 = vector.extract_strided_slice %17 {offsets = [0, 0, 40], sizes = [1, 8, 8], strides = [1, 1, 1]} : vector<1x8x64xf32> to vector<1x8x8xf32>
    %28 = arith.maximumf %26, %27 : vector<1x8x8xf32>
    %29 = vector.extract_strided_slice %17 {offsets = [0, 0, 48], sizes = [1, 8, 8], strides = [1, 1, 1]} : vector<1x8x64xf32> to vector<1x8x8xf32>
    %30 = arith.maximumf %28, %29 : vector<1x8x8xf32>
    %31 = vector.extract_strided_slice %17 {offsets = [0, 0, 56], sizes = [1, 8, 8], strides = [1, 1, 1]} : vector<1x8x64xf32> to vector<1x8x8xf32>
    %32 = arith.maximumf %30, %31 : vector<1x8x8xf32>
    %33 = tpu.concatenate %32, %32, %32, %32, %32, %32, %32, %32 in 2 : vector<1x8x8xf32>, vector<1x8x8xf32>, vector<1x8x8xf32>, vector<1x8x8xf32>, vector<1x8x8xf32>, vector<1x8x8xf32>, vector<1x8x8xf32>, vector<1x8x8xf32> -> vector<1x8x64xf32>
    %34 = arith.subf %17, %33 : vector<1x8x64xf32>
    %35 = math.exp %34 : vector<1x8x64xf32>
    %36 = vector.extract_strided_slice %35 {offsets = [0, 0, 0], sizes = [1, 8, 8], strides = [1, 1, 1]} : vector<1x8x64xf32> to vector<1x8x8xf32>
    %37 = vector.extract_strided_slice %35 {offsets = [0, 0, 8], sizes = [1, 8, 8], strides = [1, 1, 1]} : vector<1x8x64xf32> to vector<1x8x8xf32>
    %38 = arith.addf %36, %37 : vector<1x8x8xf32>
    %39 = vector.extract_strided_slice %35 {offsets = [0, 0, 16], sizes = [1, 8, 8], strides = [1, 1, 1]} : vector<1x8x64xf32> to vector<1x8x8xf32>
    %40 = arith.addf %38, %39 : vector<1x8x8xf32>
    %41 = vector.extract_strided_slice %35 {offsets = [0, 0, 24], sizes = [1, 8, 8], strides = [1, 1, 1]} : vector<1x8x64xf32> to vector<1x8x8xf32>
    %42 = arith.addf %40, %41 : vector<1x8x8xf32>
    %43 = vector.extract_strided_slice %35 {offsets = [0, 0, 32], sizes = [1, 8, 8], strides = [1, 1, 1]} : vector<1x8x64xf32> to vector<1x8x8xf32>
    %44 = arith.addf %42, %43 : vector<1x8x8xf32>
    %45 = vector.extract_strided_slice %35 {offsets = [0, 0, 40], sizes = [1, 8, 8], strides = [1, 1, 1]} : vector<1x8x64xf32> to vector<1x8x8xf32>
    %46 = arith.addf %44, %45 : vector<1x8x8xf32>
    %47 = vector.extract_strided_slice %35 {offsets = [0, 0, 48], sizes = [1, 8, 8], strides = [1, 1, 1]} : vector<1x8x64xf32> to vector<1x8x8xf32>
    %48 = arith.addf %46, %47 : vector<1x8x8xf32>
    %49 = vector.extract_strided_slice %35 {offsets = [0, 0, 56], sizes = [1, 8, 8], strides = [1, 1, 1]} : vector<1x8x64xf32> to vector<1x8x8xf32>
    %50 = arith.addf %48, %49 : vector<1x8x8xf32>
    %51 = tpu.concatenate %50, %50, %50, %50, %50, %50, %50, %50 in 2 : vector<1x8x8xf32>, vector<1x8x8xf32>, vector<1x8x8xf32>, vector<1x8x8xf32>, vector<1x8x8xf32>, vector<1x8x8xf32>, vector<1x8x8xf32>, vector<1x8x8xf32> -> vector<1x8x64xf32>
    %52 = arith.divf %35, %51 : vector<1x8x64xf32>
    %c0_7 = arith.constant 0 : index
    %c0_8 = arith.constant 0 : index
    %c0_9 = arith.constant 0 : index
    %53 = vector.load %arg9[%c0_7, %c0_8, %c0_9] : memref<1x8x64xf32, #tpu.memory_space<vmem>>, vector<1x8x64xf32>
    tpu.vector_store %arg9[%c0_7, %c0_8, %c0_9], %52 {strides = array<i32>} : memref<1x8x64xf32, #tpu.memory_space<vmem>>, vector<1x8x64xf32>,
    %54 = arith.truncf %10 : vector<1x8x64xf32> to vector<1x8x64xbf16>
    %55 = tpu.concatenate %54, %54, %54, %54, %54, %54, %54, %54 in 1 : vector<1x8x64xbf16>, vector<1x8x64xbf16>, vector<1x8x64xbf16>, vector<1x8x64xbf16>, vector<1x8x64xbf16>, vector<1x8x64xbf16>, vector<1x8x64xbf16>, vector<1x8x64xbf16> -> vector<1x64x64xbf16>
    %56 = vector.shape_cast %11 : vector<64x64xbf16> to vector<1x64x64xbf16>
    %57 = arith.mulf %55, %56 : vector<1x64x64xbf16>
    %58 = arith.truncf %52 : vector<1x8x64xf32> to vector<1x8x64xbf16>
    "tpu.trace_start"() <{level = 10 : i32, message = "bqn,bnd->bqd"}> : () -> ()
    %cst_10 = arith.constant dense<0.000000e+00> : vector<1x8x64xf32>
    %59 = tpu.matmul %58, %57, %cst_10 {dimension_numbers = #tpu.dot_dimension_numbers<[2], [1], [1], [2], [0, 0, 0, 1, 1, 2], [0], [0]>} : vector<1x8x64xbf16>, vector<1x64x64xbf16>, vector<1x8x64xf32> -> vector<1x8x64xf32>
    "tpu.trace_stop"() : () -> ()
    %60 = vector.shape_cast %59 : vector<1x8x64xf32> to vector<8x64xf32>
    %61 = arith.truncf %60 : vector<8x64xf32> to vector<8x64xbf16>
    %c0_11 = arith.constant 0 : index
    %c0_12 = arith.constant 0 : index
    %62 = vector.load %arg3[%c0_11, %c0_12] : memref<64x64xbf16, #tpu.memory_space<vmem>>, vector<64x64xbf16>
    %cst_13 = arith.constant dense<0.000000e+00> : vector<8x64xf32>
    %63 = tpu.matmul %61, %62, %cst_13 {dimension_numbers = #tpu.dot_dimension_numbers<[1], [0], [0], [1], [0, 0, 1, 1], [], []>} : vector<8x64xbf16>, vector<64x64xbf16>, vector<8x64xf32> -> vector<8x64xf32>
    %c0_14 = arith.constant 0 : index
    %c0_15 = arith.constant 0 : index
    %64 = vector.load %arg4[%c0_14, %c0_15] : memref<1x64xf32, #tpu.memory_space<vmem>>, vector<1x64xf32>
    %65 = vector.broadcast %64 : vector<1x64xf32> to vector<8x64xf32>
    %66 = arith.addf %63, %65 : vector<8x64xf32>
    %67 = arith.addf %66, %1 : vector<8x64xf32>
    %cst_16 = arith.constant dense<0.000000e+00> : vector<8xf32>
    %68 = vector.multi_reduction <add>, %67, %cst_16 [1] : vector<8x64xf32> to vector<8xf32>
    %69 = vector.shape_cast %68 : vector<8xf32> to vector<8x1xf32>
    %cst_17 = arith.constant 6.400000e+01 : f32
    %70 = vector.broadcast %cst_17 : f32 to vector<8x1xf32>
    %71 = arith.divf %69, %70 : vector<8x1xf32>
    %72 = vector.broadcast %71 : vector<8x1xf32> to vector<8x64xf32>
    %73 = arith.subf %67, %72 : vector<8x64xf32>
    %74 = arith.mulf %73, %73 : vector<8x64xf32>
    %cst_18 = arith.constant dense<0.000000e+00> : vector<8xf32>
    %75 = vector.multi_reduction <add>, %74, %cst_18 [1] : vector<8x64xf32> to vector<8xf32>
    %76 = vector.shape_cast %75 : vector<8xf32> to vector<8x1xf32>
    %cst_19 = arith.constant 6.400000e+01 : f32
    %77 = vector.broadcast %cst_19 : f32 to vector<8x1xf32>
    %78 = arith.divf %76, %77 : vector<8x1xf32>
    %79 = vector.broadcast %71 : vector<8x1xf32> to vector<8x64xf32>
    %80 = arith.subf %67, %79 : vector<8x64xf32>
    %cst_20 = arith.constant 9.99999974E-6 : f32
    %81 = vector.broadcast %cst_20 : f32 to vector<8x1xf32>
    %82 = arith.addf %78, %81 : vector<8x1xf32>
    %83 = math.rsqrt %82 : vector<8x1xf32>
    %84 = vector.broadcast %83 : vector<8x1xf32> to vector<8x64xf32>
    %85 = arith.mulf %80, %84 : vector<8x64xf32>
    %c0_21 = arith.constant 0 : index
    %c0_22 = arith.constant 0 : index
    %86 = vector.load %arg5[%c0_21, %c0_22] : memref<1x64xf32, #tpu.memory_space<vmem>>, vector<1x64xf32>
    %87 = vector.broadcast %86 : vector<1x64xf32> to vector<8x64xf32>
    %88 = arith.mulf %85, %87 : vector<8x64xf32>
    %c0_23 = arith.constant 0 : index
    %c0_24 = arith.constant 0 : index
    %89 = vector.load %arg6[%c0_23, %c0_24] : memref<1x64xf32, #tpu.memory_space<vmem>>, vector<1x64xf32>
    %90 = vector.broadcast %89 : vector<1x64xf32> to vector<8x64xf32>
    %91 = arith.addf %88, %90 : vector<8x64xf32>
    %92 = vector.shape_cast %91 : vector<8x64xf32> to vector<1x8x64xf32>
    %c0_25 = arith.constant 0 : index
    %c0_26 = arith.constant 0 : index
    %c0_27 = arith.constant 0 : index
    %93 = vector.load %arg8[%c0_25, %c0_26, %c0_27] : memref<1x8x64xf32, #tpu.memory_space<vmem>>, vector<1x8x64xf32>
    tpu.vector_store %arg8[%c0_25, %c0_26, %c0_27], %92 {strides = array<i32>} : memref<1x8x64xf32, #tpu.memory_space<vmem>>, vector<1x8x64xf32>,
    return
  }
  func.func @transform_0(%arg0: i32) -> (i32, i32, i32) {
    %c0_i32 = arith.constant 0 : i32
    %c0_i32_0 = arith.constant 0 : i32
    %c0_i32_1 = arith.constant 0 : i32
    return %arg0, %c0_i32, %c0_i32_0 : i32, i32, i32
  }
  func.func @transform_1(%arg0: i32) -> (i32, i32) {
    %c0_i32 = arith.constant 0 : i32
    %c0_i32_0 = arith.constant 0 : i32
    %c0_i32_1 = arith.constant 0 : i32
    return %c0_i32, %c0_i32_0 : i32, i32
  }
  func.func @transform_2(%arg0: i32) -> (i32, i32) {
    %c0_i32 = arith.constant 0 : i32
    %c0_i32_0 = arith.constant 0 : i32
    %c0_i32_1 = arith.constant 0 : i32
    return %c0_i32, %c0_i32_0 : i32, i32
  }
  func.func @transform_3(%arg0: i32) -> (i32, i32) {
    %c0_i32 = arith.constant 0 : i32
    %c0_i32_0 = arith.constant 0 : i32
    %c0_i32_1 = arith.constant 0 : i32
    return %c0_i32, %c0_i32_0 : i32, i32
  }
  func.func @transform_4(%arg0: i32) -> (i32, i32) {
    %c0_i32 = arith.constant 0 : i32
    %c0_i32_0 = arith.constant 0 : i32
    %c0_i32_1 = arith.constant 0 : i32
    return %c0_i32, %c0_i32_0 : i32, i32
  }
  func.func @transform_5(%arg0: i32) -> (i32, i32) {
    %c0_i32 = arith.constant 0 : i32
    %c0_i32_0 = arith.constant 0 : i32
    %c0_i32_1 = arith.constant 0 : i32
    return %c0_i32, %c0_i32_0 : i32, i32
  }
  func.func @transform_6(%arg0: i32) -> (i32, i32) {
    %c0_i32 = arith.constant 0 : i32
    %c0_i32_0 = arith.constant 0 : i32
    %c0_i32_1 = arith.constant 0 : i32
    return %c0_i32, %c0_i32_0 : i32, i32
  }
  func.func @transform_7(%arg0: i32) -> (i32, i32, i32) {
    %c0_i32 = arith.constant 0 : i32
    %c0_i32_0 = arith.constant 0 : i32
    %c0_i32_1 = arith.constant 0 : i32
    return %arg0, %c0_i32, %c0_i32_0 : i32, i32, i32
  }
  func.func @transform_8(%arg0: i32) -> (i32, i32, i32) {
    %c0_i32 = arith.constant 0 : i32
    %c0_i32_0 = arith.constant 0 : i32
    %c0_i32_1 = arith.constant 0 : i32
    return %arg0, %c0_i32, %c0_i32_0 : i32, i32, i32
  }
}

</mosaic_0001>

<llo_original>
// kernel: tpu_custom_call.1
$region0: #{tpu_custom_call.1}
  #allocation0 [shape = 'u32[]', space=smem, size = 0x4, offset = 0x4, fixed_abs, tag = 'smem constant byte address 0x4 - core index']
  #allocation1 [shape = 'u32[144,128]{1,0:T(1,128)}', space=vmem, size = 0x12000, scoped, tag = 'internal scratch']
  %s0 = inlined_call_operand.hbm [shape: f32[2,8,64], index: 0, kind: input, shape index: {}]
  %s1 = inlined_call_operand.hbm [shape: bf16[64,192], index: 1, kind: input, shape index: {}]
  %s2 = inlined_call_operand.hbm [shape: bf16[64,64], index: 2, kind: input, shape index: {}]
  %s3 = inlined_call_operand.vmem [shape: f32[1,64], index: 3, kind: input, shape index: {}]
  %s4 = inlined_call_operand.vmem [shape: f32[1,64], index: 4, kind: input, shape index: {}]
  %s5 = inlined_call_operand.vmem [shape: f32[1,64], index: 5, kind: input, shape index: {}]
  %s6 = inlined_call_operand.hbm [shape: bf16[64,64], index: 6, kind: input, shape index: {}]
  %s7 = inlined_call_operand.hbm [shape: f32[2,8,64], index: 7, kind: output, shape index: {0}]
  %s8 = inlined_call_operand.hbm [shape: f32[2,8,64], index: 8, kind: output, shape index: {1}]
  %9 = xla_tuple %s7, %s8
  %s10 = sld [smem:[#allocation0]]
  $region85: #{tpu_custom_call.1} parent=0
    _
  %s12 = ssub.s32 1, %s10
  %s13 = scalar_select 0, %s12, %s10
  $region1: #{tpu_custom_call.1} parent=0
    #allocation2 [shape = 'u8[8192]{0}', space=vmem, size = 0x2000, scoped, tag = 'input window, operand 0']
    #allocation3 [shape = 's32[2]{0}', space=sflag, size = 0x8, scoped, tag = 'scoped memory for tpu_custom_call.1']
    #allocation4 [shape = 's32[2]{0}', space=sflag, size = 0x8, scoped, tag = 'scoped memory for tpu_custom_call.1']
    #allocation5 [shape = 'u8[32768]{0}', space=vmem, size = 0x8000, scoped, tag = 'input window, operand 1, single buffered']
    #allocation6 [shape = 's32[1]{0}', space=sflag, size = 0x4, scoped, tag = 'scoped memory for tpu_custom_call.1']
    #allocation7 [shape = 'u8[16384]{0}', space=vmem, size = 0x4000, scoped, tag = 'input window, operand 2, single buffered']
    #allocation8 [shape = 'u8[16384]{0}', space=vmem, size = 0x4000, scoped, tag = 'input window, operand 6, single buffered']
    #allocation9 [shape = 's32[1]{0}', space=sflag, size = 0x4, scoped, tag = 'scoped memory for tpu_custom_call.1']
    #allocation10 [shape = 'u8[8192]{0}', space=vmem, size = 0x2000, scoped, tag = 'output window, operand 0']
    #allocation11 [shape = 'u8[8192]{0}', space=vmem, size = 0x2000, scoped, tag = 'output window, operand 1']
    #allocation12 [shape = 's32[2]{0}', space=sflag, size = 0x8, scoped, tag = 'scoped memory for tpu_custom_call.1']
    %14 = vsyncpa [#allocation3], 0
    %s15 = scalar_lea.sflag [#allocation3], 1
    %16 = vsyncpa %s15, 0
    %17 = vsyncpa [#allocation6], 0
    %18 = vsyncpa [#allocation9], 0
    %19 = vsyncpa [#allocation4], 0
    %s20 = scalar_lea.sflag [#allocation4], 1
    %21 = vsyncpa %s20, 0
    %22 = vsyncpa [#allocation12], 0
    %s23 = scalar_lea.sflag [#allocation12], 1
    %24 = vsyncpa %s23, 0
    loop: start=0, step=1, limit=4
    $region2: #{tpu_custom_call.1} parent=1 // loop_pre_header
      _
    $region3: #{tpu_custom_call.1} parent=1 // loop_header
      %s26 = sphi 0, %s30
      %p27 = scmp.ge.s32.totalorder %s26, 4
      %s36 = sphi 0, %s38
      %s39 = sphi 0, %s36
      %s40 = sphi 0, %s39
      %s56 = sphi 0, %s40
      %s60 = sphi 0, %s60
      %s62 = sphi 0, %s60
      %s63 = sphi 0, %s62
      %s77 = sphi 0, %s63
      %s81 = sphi 0, %s81
      %s83 = sphi 0, %s81
      %s84 = sphi 0, %s83
      %s98 = sphi 0, %s84
      %s102 = sphi 0, %s102
      %s104 = sphi 0, %s102
      %s105 = sphi 0, %s104
      %s119 = sphi 0, %s105
      %s123 = sphi 0, %s123
      %s125 = sphi 0, %s123
      %s126 = sphi 0, %s125
      %s140 = sphi 0, %s126
      %s144 = sphi 0, %s144
      %s146 = sphi 0, %s144
      %s147 = sphi 0, %s146
      %s161 = sphi 0, %s147
      %s165 = sphi 0, %s165
      %s167 = sphi 0, %s165
      %s168 = sphi 0, %s167
      %s182 = sphi 0, %s168
      %s188 = sphi 0, %s190
      %s191 = sphi 0, %s188
      %s192 = sphi 0, %s191
      %s208 = sphi 0, %s192
      %s214 = sphi 0, %s216
      %s217 = sphi 0, %s214
      %s218 = sphi 0, %s217
      %s234 = sphi 0, %s218
    $region4: #{tpu_custom_call.1} parent=1 // loop_header_branch
      %29 = sbr.rel (%p27) target = $region8
    $region5: #{tpu_custom_call.1} parent=1 // loop_body
      %s31 = ssub.s32 %s26, 1
      %s32 = ssub.s32 %s26, 2
      %s33 = sadd.s32 %s26, 1
      %s34 = ssub.s32 %s26, %s33
      %p35 = scmp.eq.s32.totalorder %s34, 0
      %s37 = sadd.s32 %s36, 1
      %s38 = scalar_select %p35, %s36, %s37
      %p41 = pneg %p35
      %p42 = scmp.eq.s32.totalorder %s26, 1
      %p43 = por %p41, %p42
      %p44 = scmp.ne.s32.totalorder %s36, %s39
      %p45 = scmp.eq.s32.totalorder %s26, 0
      %p46 = por %p44, %p45
      %p47 = scmp.ne.s32.totalorder %s36, %s39
      %p48 = scmp.eq.s32.totalorder %s31, 1
      %p49 = por %p47, %p48
      %p50 = scmp.ne.s32.totalorder %s39, %s40
      %p51 = scmp.eq.s32.totalorder %s31, 0
      %p52 = por %p50, %p51
      %p53 = scmp.ne.s32.totalorder %s39, %s40
      %p54 = scmp.eq.s32.totalorder %s32, 1
      %p55 = por %p53, %p54
      %p57 = scmp.ne.s32.totalorder %s40, %s56
      %p58 = scmp.eq.s32.totalorder %s32, 0
      %p59 = por %p57, %p58
      %s61 = sadd.s32 %s60, 1
      %p64 = scmp.eq.s32.totalorder %s26, 1
      %p65 = scmp.ne.s32.totalorder %s60, %s62
      %p66 = scmp.eq.s32.totalorder %s26, 0
      %p67 = por %p65, %p66
      %p68 = scmp.ne.s32.totalorder %s60, %s62
      %p69 = scmp.eq.s32.totalorder %s31, 1
      %p70 = por %p68, %p69
      %p71 = scmp.ne.s32.totalorder %s62, %s63
      %p72 = scmp.eq.s32.totalorder %s31, 0
      %p73 = por %p71, %p72
      %p74 = scmp.ne.s32.totalorder %s62, %s63
      %p75 = scmp.eq.s32.totalorder %s32, 1
      %p76 = por %p74, %p75
      %p78 = scmp.ne.s32.totalorder %s63, %s77
      %p79 = scmp.eq.s32.totalorder %s32, 0
      %p80 = por %p78, %p79
      %s82 = sadd.s32 %s81, 1
      %p85 = scmp.eq.s32.totalorder %s26, 1
      %p86 = scmp.ne.s32.totalorder %s81, %s83
      %p87 = scmp.eq.s32.totalorder %s26, 0
      %p88 = por %p86, %p87
      %p89 = scmp.ne.s32.totalorder %s81, %s83
      %p90 = scmp.eq.s32.totalorder %s31, 1
      %p91 = por %p89, %p90
      %p92 = scmp.ne.s32.totalorder %s83, %s84
      %p93 = scmp.eq.s32.totalorder %s31, 0
      %p94 = por %p92, %p93
      %p95 = scmp.ne.s32.totalorder %s83, %s84
      %p96 = scmp.eq.s32.totalorder %s32, 1
      %p97 = por %p95, %p96
      %p99 = scmp.ne.s32.totalorder %s84, %s98
      %p100 = scmp.eq.s32.totalorder %s32, 0
      %p101 = por %p99, %p100
      %s103 = sadd.s32 %s102, 1
      %p106 = scmp.eq.s32.totalorder %s26, 1
      %p107 = scmp.ne.s32.totalorder %s102, %s104
      %p108 = scmp.eq.s32.totalorder %s26, 0
      %p109 = por %p107, %p108
      %p110 = scmp.ne.s32.totalorder %s102, %s104
      %p111 = scmp.eq.s32.totalorder %s31, 1
      %p112 = por %p110, %p111
      %p113 = scmp.ne.s32.totalorder %s104, %s105
      %p114 = scmp.eq.s32.totalorder %s31, 0
      %p115 = por %p113, %p114
      %p116 = scmp.ne.s32.totalorder %s104, %s105
      %p117 = scmp.eq.s32.totalorder %s32, 1
      %p118 = por %p116, %p117
      %p120 = scmp.ne.s32.totalorder %s105, %s119
      %p121 = scmp.eq.s32.totalorder %s32, 0
      %p122 = por %p120, %p121
      %s124 = sadd.s32 %s123, 1
      %p127 = scmp.eq.s32.totalorder %s26, 1
      %p128 = scmp.ne.s32.totalorder %s123, %s125
      %p129 = scmp.eq.s32.totalorder %s26, 0
      %p130 = por %p128, %p129
      %p131 = scmp.ne.s32.totalorder %s123, %s125
      %p132 = scmp.eq.s32.totalorder %s31, 1
      %p133 = por %p131, %p132
      %p134 = scmp.ne.s32.totalorder %s125, %s126
      %p135 = scmp.eq.s32.totalorder %s31, 0
      %p136 = por %p134, %p135
      %p137 = scmp.ne.s32.totalorder %s125, %s126
      %p138 = scmp.eq.s32.totalorder %s32, 1
      %p139 = por %p137, %p138
      %p141 = scmp.ne.s32.totalorder %s126, %s140
      %p142 = scmp.eq.s32.totalorder %s32, 0
      %p143 = por %p141, %p142
      %s145 = sadd.s32 %s144, 1
      %p148 = scmp.eq.s32.totalorder %s26, 1
      %p149 = scmp.ne.s32.totalorder %s144, %s146
      %p150 = scmp.eq.s32.totalorder %s26, 0
      %p151 = por %p149, %p150
      %p152 = scmp.ne.s32.totalorder %s144, %s146
      %p153 = scmp.eq.s32.totalorder %s31, 1
      %p154 = por %p152, %p153
      %p155 = scmp.ne.s32.totalorder %s146, %s147
      %p156 = scmp.eq.s32.totalorder %s31, 0
      %p157 = por %p155, %p156
      %p158 = scmp.ne.s32.totalorder %s146, %s147
      %p159 = scmp.eq.s32.totalorder %s32, 1
      %p160 = por %p158, %p159
      %p162 = scmp.ne.s32.totalorder %s147, %s161
      %p163 = scmp.eq.s32.totalorder %s32, 0
      %p164 = por %p162, %p163
      %s166 = sadd.s32 %s165, 1
      %p169 = scmp.eq.s32.totalorder %s26, 1
      %p170 = scmp.ne.s32.totalorder %s165, %s167
      %p171 = scmp.eq.s32.totalorder %s26, 0
      %p172 = por %p170, %p171
      %p173 = scmp.ne.s32.totalorder %s165, %s167
      %p174 = scmp.eq.s32.totalorder %s31, 1
      %p175 = por %p173, %p174
      %p176 = scmp.ne.s32.totalorder %s167, %s168
      %p177 = scmp.eq.s32.totalorder %s31, 0
      %p178 = por %p176, %p177
      %p179 = scmp.ne.s32.totalorder %s167, %s168
      %p180 = scmp.eq.s32.totalorder %s32, 1
      %p181 = por %p179, %p180
      %p183 = scmp.ne.s32.totalorder %s168, %s182
      %p184 = scmp.eq.s32.totalorder %s32, 0
      %p185 = por %p183, %p184
      %s186 = ssub.s32 %s26, %s33
      %p187 = scmp.eq.s32.totalorder %s186, 0
      %s189 = sadd.s32 %s188, 1
      %s190 = scalar_select %p187, %s188, %s189
      %p193 = pneg %p187
      %p194 = scmp.eq.s32.totalorder %s26, 1
      %p195 = por %p193, %p194
      %p196 = scmp.ne.s32.totalorder %s188, %s191
      %p197 = scmp.eq.s32.totalorder %s26, 0
      %p198 = por %p196, %p197
      %p199 = scmp.ne.s32.totalorder %s188, %s191
      %p200 = scmp.eq.s32.totalorder %s31, 1
      %p201 = por %p199, %p200
      %p202 = scmp.ne.s32.totalorder %s191, %s192
      %p203 = scmp.eq.s32.totalorder %s31, 0
      %p204 = por %p202, %p203
      %p205 = scmp.ne.s32.totalorder %s191, %s192
      %p206 = scmp.eq.s32.totalorder %s32, 1
      %p207 = por %p205, %p206
      %p209 = scmp.ne.s32.totalorder %s192, %s208
      %p210 = scmp.eq.s32.totalorder %s32, 0
      %p211 = por %p209, %p210
      %s212 = ssub.s32 %s26, %s33
      %p213 = scmp.eq.s32.totalorder %s212, 0
      %s215 = sadd.s32 %s214, 1
      %s216 = scalar_select %p213, %s214, %s215
      %p219 = pneg %p213
      %p220 = scmp.eq.s32.totalorder %s26, 1
      %p221 = por %p219, %p220
      %p222 = scmp.ne.s32.totalorder %s214, %s217
      %p223 = scmp.eq.s32.totalorder %s26, 0
      %p224 = por %p222, %p223
      %p225 = scmp.ne.s32.totalorder %s214, %s217
      %p226 = scmp.eq.s32.totalorder %s31, 1
      %p227 = por %p225, %p226
      %p228 = scmp.ne.s32.totalorder %s217, %s218
      %p229 = scmp.eq.s32.totalorder %s31, 0
      %p230 = por %p228, %p229
      %p231 = scmp.ne.s32.totalorder %s217, %s218
      %p232 = scmp.eq.s32.totalorder %s32, 1
      %p233 = por %p231, %p232
      %p235 = scmp.ne.s32.totalorder %s218, %s234
      %p236 = scmp.eq.s32.totalorder %s32, 0
      %p237 = por %p235, %p236
      %p238 = scmp.le.s32.totalorder 1, %s26
      %p239 = scmp.lt.s32.totalorder %s26, 3
      %p240 = pnand %p238, %p239
      %p241 = pneg %p240
      // Predicated region
      $region9: #{tpu_custom_call.1} parent=5 // pred_check
        _
      $region10: #{tpu_custom_call.1} parent=5 // pred_check_branch
        %243 = sbr.rel (%p240) target = $region12
      $region11: #{tpu_custom_call.1} parent=5 // pred_region
        %s244 = ssub.s32 %s26, 1
        // Predicated region
        $region13: #{tpu_custom_call.1} parent=11 // pred_check
          %p245 = pneg %p73
        $region14: #{tpu_custom_call.1} parent=11 // pred_check_branch
          %247 = sbr.rel (%p245) target = $region16
        $region15: #{tpu_custom_call.1} parent=11 // pred_region
          %s249 = ssub.s32 1024, 1024
          %250 = vsyncadd [#allocation6], %s249
          %s251 = sshll.u32 [#allocation5], 4
          %s252 = int_to_ptr.vmem [resolvable:$true] %s251
          %257 = dma.hbm_to_vmem [thread:$0]  %s1, 1024, %s252, [#allocation6], 128, 128, 8
        $region16: #{tpu_custom_call.1} parent=11 // pred_fallthru
          _
        // Predicated region
        $region17: #{tpu_custom_call.1} parent=11 // pred_check
          %p258 = pneg %p94
        $region18: #{tpu_custom_call.1} parent=11 // pred_check_branch
          %260 = sbr.rel (%p258) target = $region20
        $region19: #{tpu_custom_call.1} parent=11 // pred_region
          %s262 = ssub.s32 512, 512
          %263 = vsyncadd [#allocation6], %s262
          %s264 = sshll.u32 [#allocation7], 4
          %s265 = int_to_ptr.vmem [resolvable:$true] %s264
          %270 = dma.hbm_to_vmem [thread:$0]  %s2, 512, %s265, [#allocation6], 64, 64, 4
        $region20: #{tpu_custom_call.1} parent=11 // pred_fallthru
          _
        // Predicated region
        $region21: #{tpu_custom_call.1} parent=11 // pred_check
          %p271 = pneg %p115
        $region22: #{tpu_custom_call.1} parent=11 // pred_check_branch
          %273 = sbr.rel (%p271) target = $region24
        $region23: #{tpu_custom_call.1} parent=11 // pred_region
          _
        $region24: #{tpu_custom_call.1} parent=11 // pred_fallthru
          _
        // Predicated region
        $region25: #{tpu_custom_call.1} parent=11 // pred_check
          %p274 = pneg %p136
        $region26: #{tpu_custom_call.1} parent=11 // pred_check_branch
          %276 = sbr.rel (%p274) target = $region28
        $region27: #{tpu_custom_call.1} parent=11 // pred_region
          _
        $region28: #{tpu_custom_call.1} parent=11 // pred_fallthru
          _
        // Predicated region
        $region29: #{tpu_custom_call.1} parent=11 // pred_check
          %p277 = pneg %p157
        $region30: #{tpu_custom_call.1} parent=11 // pred_check_branch
          %279 = sbr.rel (%p277) target = $region32
        $region31: #{tpu_custom_call.1} parent=11 // pred_region
          _
        $region32: #{tpu_custom_call.1} parent=11 // pred_fallthru
          _
        // Predicated region
        $region33: #{tpu_custom_call.1} parent=11 // pred_check
          %p280 = pneg %p178
        $region34: #{tpu_custom_call.1} parent=11 // pred_check_branch
          %282 = sbr.rel (%p280) target = $region36
        $region35: #{tpu_custom_call.1} parent=11 // pred_region
          %s284 = ssub.s32 512, 512
          %285 = vsyncadd [#allocation9], %s284
          %s286 = sshll.u32 [#allocation8], 4
          %s287 = int_to_ptr.vmem [resolvable:$true] %s286
          %292 = dma.hbm_to_vmem [thread:$0]  %s6, 512, %s287, [#allocation9], 64, 64, 4
        $region36: #{tpu_custom_call.1} parent=11 // pred_fallthru
          _
      $region12: #{tpu_custom_call.1} parent=5 // pred_fallthru
        _
      %p293 = scmp.lt.s32.totalorder %s26, 2
      // Predicated region
      $region37: #{tpu_custom_call.1} parent=5 // pred_check
        %p294 = pneg %p293
      $region38: #{tpu_custom_call.1} parent=5 // pred_check_branch
        %296 = sbr.rel (%p294) target = $region40
      $region39: #{tpu_custom_call.1} parent=5 // pred_region
        // Predicated region
        $region41: #{tpu_custom_call.1} parent=39 // pred_check
          %p297 = pneg %p46
        $region42: #{tpu_custom_call.1} parent=39 // pred_check_branch
          %299 = sbr.rel (%p297) target = $region44
        $region43: #{tpu_custom_call.1} parent=39 // pred_region
          %s300 = sand.u32 %s36, 1
          %s301 = scalar_lea.sflag [#allocation3], %s300
          %s302 = sand.u32 %s36, 1
          %s303 = smul.addr %s302, 8
          %s304 = scalar_lea.vmem [#allocation2], %s303
          %s306 = ssub.s32 128, 128
          %307 = vsyncadd %s301, %s306
          %s308 = smul.addr %s26, 128
          %s309 = scalar_lea.hbm %s0, %s308
          %s311 = sshll.u32 %s304, 4
          %s312 = int_to_ptr.vmem [resolvable:$true] %s311
          %314 = dma.hbm_to_vmem [thread:$0]  %s309, 128, %s312, %s301
        $region44: #{tpu_custom_call.1} parent=39 // pred_fallthru
          _
      $region40: #{tpu_custom_call.1} parent=5 // pred_fallthru
        _
      %p315 = scmp.le.s32.totalorder 1, %s26
      %p316 = scmp.lt.s32.totalorder %s26, 3
      %p317 = pnand %p315, %p316
      %p318 = pneg %p317
      // Predicated region
      $region45: #{tpu_custom_call.1} parent=5 // pred_check
        _
      $region46: #{tpu_custom_call.1} parent=5 // pred_check_branch
        %320 = sbr.rel (%p317) target = $region48
      $region47: #{tpu_custom_call.1} parent=5 // pred_region
        %s321 = ssub.s32 %s26, 1
        %s322 = sand.u32 %s39, 1
        %s323 = scalar_lea.sflag [#allocation3], %s322
        %s324 = sand.u32 %s39, 1
        %s325 = smul.addr %s324, 8
        %s326 = scalar_lea.vmem [#allocation2], %s325
        // Predicated region
        $region49: #{tpu_custom_call.1} parent=47 // pred_check
          %p327 = pneg %p52
        $region50: #{tpu_custom_call.1} parent=47 // pred_check_branch
          %329 = sbr.rel (%p327) target = $region52
        $region51: #{tpu_custom_call.1} parent=47 // pred_region
          %330 = dma.done %s323, 128
        $region52: #{tpu_custom_call.1} parent=47 // pred_fallthru
          _
        // Predicated region
        $region53: #{tpu_custom_call.1} parent=47 // pred_check
          %p331 = pneg %p73
        $region54: #{tpu_custom_call.1} parent=47 // pred_check_branch
          %333 = sbr.rel (%p331) target = $region56
        $region55: #{tpu_custom_call.1} parent=47 // pred_region
          %334 = dma.done [#allocation6], 1024
        $region56: #{tpu_custom_call.1} parent=47 // pred_fallthru
          _
        // Predicated region
        $region57: #{tpu_custom_call.1} parent=47 // pred_check
          %p335 = pneg %p94
        $region58: #{tpu_custom_call.1} parent=47 // pred_check_branch
          %337 = sbr.rel (%p335) target = $region60
        $region59: #{tpu_custom_call.1} parent=47 // pred_region
          %338 = dma.done [#allocation6], 512
        $region60: #{tpu_custom_call.1} parent=47 // pred_fallthru
          _
        // Predicated region
        $region61: #{tpu_custom_call.1} parent=47 // pred_check
          %p339 = pneg %p178
        $region62: #{tpu_custom_call.1} parent=47 // pred_check_branch
          %341 = sbr.rel (%p339) target = $region64
        $region63: #{tpu_custom_call.1} parent=47 // pred_region
          %342 = dma.done [#allocation9], 512
        $region64: #{tpu_custom_call.1} parent=47 // pred_fallthru
          _
        %s343 = sand.u32 %s39, 1
        %s344 = scalar_lea.sflag [#allocation3], %s343
        %s345 = sand.u32 %s39, 1
        %s346 = smul.addr %s345, 8
        %s347 = scalar_lea.vmem [#allocation2], %s346
        %p348 = pneg %p52
        %p349 = pneg %p49
        %p350 = pneg %p73
        %p351 = pneg %p70
        %p352 = pneg %p94
        %p353 = pneg %p91
        %p354 = pneg %p115
        %p355 = pneg %p112
        %p356 = pneg %p136
        %p357 = pneg %p133
        %p358 = pneg %p157
        %p359 = pneg %p154
        %p360 = pneg %p178
        %p361 = pneg %p175
        %p362 = pneg %p204
        %p363 = pneg %p201
        %s364 = sand.u32 %s191, 1
        %s365 = scalar_lea.sflag [#allocation4], %s364
        %s366 = sand.u32 %s191, 1
        %s367 = smul.addr %s366, 8
        %s368 = scalar_lea.vmem [#allocation10], %s367
        %p369 = pneg %p230
        %p370 = pneg %p227
        %s371 = sand.u32 %s217, 1
        %s372 = scalar_lea.sflag [#allocation12], %s371
        %s373 = sand.u32 %s217, 1
        %s374 = smul.addr %s373, 8
        %s375 = scalar_lea.vmem [#allocation11], %s374
        %v377 = vld [vmem:[%s326] sm:$0xff]
        %v378 = vpack.c.bf16 %v377, %v377
        %v379 = vld [vmem:[#allocation5] sm:$0xff]
        %v380 = vld [vmem:[#allocation5 + $0x8] sm:$0xff]
        %v381 = vld [vmem:[#allocation5 + $0x10] sm:$0xff]
        %v382 = vld [vmem:[#allocation5 + $0x18] sm:$0xff]
        %v383 = vld [vmem:[#allocation5 + $0x20] sm:$0xff]
        %v384 = vld [vmem:[#allocation5 + $0x28] sm:$0xff]
        %v385 = vld [vmem:[#allocation5 + $0x30] sm:$0xff]
        %v386 = vld [vmem:[#allocation5 + $0x38] sm:$0xff]
        %v395 = vunpack.c.l.b16 %v379
        %v396 = vunpack.c.h.b16 %v379
        %v397 = vunpack.c.l.b16 %v380
        %v398 = vunpack.c.h.b16 %v380
        %v399 = vunpack.c.l.b16 %v381
        %v400 = vunpack.c.h.b16 %v381
        %v401 = vunpack.c.l.b16 %v382
        %v402 = vunpack.c.h.b16 %v382
        %v403 = vunpack.c.l.b16 %v383
        %v404 = vunpack.c.h.b16 %v383
        %v405 = vunpack.c.l.b16 %v384
        %v406 = vunpack.c.h.b16 %v384
        %v407 = vunpack.c.l.b16 %v385
        %v408 = vunpack.c.h.b16 %v385
        %v409 = vunpack.c.l.b16 %v386
        %v410 = vunpack.c.h.b16 %v386
        %v411 = vpack.c.b16 %v397, %v395
        %v412 = vpack.c.b16 %v398, %v396
        %v413 = vpack.c.b16 %v401, %v399
        %v414 = vpack.c.b16 %v402, %v400
        %v415 = vpack.c.b16 %v405, %v403
        %v416 = vpack.c.b16 %v406, %v404
        %v417 = vpack.c.b16 %v409, %v407
        %v418 = vpack.c.b16 %v410, %v408
        %vm427 = vcmask 523264
        %v429 = vsel %vm427, %v378, 0
        %431 = vmatprep.subr.bf16.mxu0 %v412
        %432 = vmatpush1.bf16.msra.mxu0 %v411
        %433 = vmatprep.subr.bf16.mxu0 %v414
        %434 = vmatpush1.bf16.msra.mxu0 %v413
        %435 = vmatprep.subr.bf16.mxu0 %v416
        %436 = vmatpush1.bf16.msra.mxu0 %v415
        %437 = vmatprep.subr.bf16.mxu0 %v418
        %438 = vmatpush1.bf16.msra.mxu0 %v417
        %439 = vmatprep.subr.bf16.mxu0 0
        %440 = vmatpush1.bf16.msra.mxu0 0
        %441 = vmatprep.subr.bf16.mxu0 0
        %442 = vmatpush1.bf16.msra.mxu0 0
        %443 = vmatprep.subr.bf16.mxu0 0
        %444 = vmatpush1.bf16.msra.mxu0 0
        %445 = vmatprep.subr.bf16.mxu0 0
        %446 = vmatpush1.bf16.msra.mxu0 0
        %447 = vmatprep.subr.bf16.mxu0 0
        %448 = vmatpush1.bf16.msra.mxu0 0
        %449 = vmatprep.subr.bf16.mxu0 0
        %450 = vmatpush1.bf16.msra.mxu0 0
        %451 = vmatprep.subr.bf16.mxu0 0
        %452 = vmatpush1.bf16.msra.mxu0 0
        %453 = vmatprep.subr.bf16.mxu0 0
        %454 = vmatpush1.bf16.msra.mxu0 0
        %455 = vmatprep.subr.bf16.mxu0 0
        %456 = vmatpush1.bf16.msra.mxu0 0
        %457 = vmatprep.subr.bf16.mxu0 0
        %458 = vmatpush1.bf16.msra.mxu0 0
        %459 = vmatprep.subr.bf16.mxu0 0
        %460 = vmatpush1.bf16.msra.mxu0 0
        %461 = vmatprep.subr.bf16.mxu0 0
        %462 = vmatpush1.bf16.msra.mxu0 0
        %463 = vmatprep.mubr.bf16.mxu0 0
        %464 = vmatmul.mubr.bf16.gmra.mrb[0].mxu0 %v429
        %v465 = vpop.f32.mrb[0].mxu0
        %v466 = vadd.f32 0.0, %v465
        %v467 = vpop.f32.mrb[0].mxu0
        %v468 = vadd.f32 0.0, %v467
        %v469 = vpop.f32.mrb[0].mxu0
        %v470 = vpop.f32.mrb[0].mxu0
        %471 = vdwg.mxu0
        %v472 = vld [vmem:[#allocation8] sm:$0xf]
        %v473 = vld [vmem:[#allocation8 + $0x4] sm:$0xf]
        %v474 = vld [vmem:[#allocation8 + $0x8] sm:$0xf]
        %v475 = vld [vmem:[#allocation8 + $0xc] sm:$0xf]
        %v476 = vld [vmem:[#allocation8 + $0x10] sm:$0xf]
        %v477 = vld [vmem:[#allocation8 + $0x14] sm:$0xf]
        %v478 = vld [vmem:[#allocation8 + $0x18] sm:$0xf]
        %v479 = vld [vmem:[#allocation8 + $0x1c] sm:$0xf]
        %v480 = vpack.c.bf16 %v466, %v466
        %v482 = vrot.slane %v480, 4
        %vm483 = vcmask 1043456
        %v486 = vsel %vm483, %v480, %v482
        %v496 = vunpack.c.l.b16 %v472
        %v497 = vunpack.c.l.b16 %v473
        %v498 = vunpack.c.l.b16 %v474
        %v499 = vunpack.c.l.b16 %v475
        %v500 = vunpack.c.l.b16 %v476
        %v501 = vunpack.c.l.b16 %v477
        %v502 = vunpack.c.l.b16 %v478
        %v503 = vunpack.c.l.b16 %v479
        %v504 = vpack.c.b16 %v497, %v496
        %v505 = vpack.c.b16 %v499, %v498
        %v506 = vpack.c.b16 %v501, %v500
        %v507 = vpack.c.b16 %v503, %v502
        %508 = vrot.lane.b32.xlu0 %v504, 64
        %v509 = vpop.permute.xlu0 %508
        %510 = vrot.lane.b32.xlu0 %v505, 64
        %v511 = vpop.permute.xlu0 %510
        %512 = vrot.lane.b32.xlu0 %v506, 64
        %v513 = vpop.permute.xlu0 %512
        %514 = vrot.lane.b32.xlu0 %v507, 64
        %v515 = vpop.permute.xlu0 %514
        %v520 = vmul.bf16 %v486, %v509
        %v521 = vmul.bf16 %v486, %v511
        %v522 = vmul.bf16 %v486, %v513
        %v523 = vmul.bf16 %v486, %v515
        %528 = vrot.lane.b32.xlu0 %v520, 64
        %v529 = vpop.permute.xlu0 %528
        %530 = vrot.lane.b32.xlu0 %v521, 64
        %v531 = vpop.permute.xlu0 %530
        %532 = vrot.lane.b32.xlu0 %v522, 64
        %v533 = vpop.permute.xlu0 %532
        %534 = vrot.lane.b32.xlu0 %v523, 64
        %v535 = vpop.permute.xlu0 %534
        %v536 = vsel %vm427, %v480, 0
        %v539 = vsel %vm427, %v529, 0
        %v542 = vsel %vm427, %v531, 0
        %v545 = vsel %vm427, %v533, 0
        %v548 = vsel %vm427, %v535, 0
        %550 = vmatprep.subr.bf16.mxu0 0
        %551 = vmatpush1.bf16.xpose.msra.mxu0 %v539
        %552 = vmatprep.subr.bf16.mxu0 0
        %553 = vmatpush1.bf16.xpose.msra.mxu0 %v542
        %554 = vmatprep.subr.bf16.mxu0 0
        %555 = vmatpush1.bf16.xpose.msra.mxu0 %v545
        %556 = vmatprep.subr.bf16.mxu0 0
        %557 = vmatpush1.bf16.xpose.msra.mxu0 %v548
        %558 = vmatprep.subr.bf16.mxu0 0
        %559 = vmatpush1.bf16.xpose.msra.mxu0 0
        %560 = vmatprep.subr.bf16.mxu0 0
        %561 = vmatpush1.bf16.xpose.msra.mxu0 0
        %562 = vmatprep.subr.bf16.mxu0 0
        %563 = vmatpush1.bf16.xpose.msra.mxu0 0
        %564 = vmatprep.subr.bf16.mxu0 0
        %565 = vmatpush1.bf16.xpose.msra.mxu0 0
        %566 = vmatprep.subr.bf16.mxu0 0
        %567 = vmatpush1.bf16.xpose.msra.mxu0 0
        %568 = vmatprep.subr.bf16.mxu0 0
        %569 = vmatpush1.bf16.xpose.msra.mxu0 0
        %570 = vmatprep.subr.bf16.mxu0 0
        %571 = vmatpush1.bf16.xpose.msra.mxu0 0
        %572 = vmatprep.subr.bf16.mxu0 0
        %573 = vmatpush1.bf16.xpose.msra.mxu0 0
        %574 = vmatprep.subr.bf16.mxu0 0
        %575 = vmatpush1.bf16.xpose.msra.mxu0 0
        %576 = vmatprep.subr.bf16.mxu0 0
        %577 = vmatpush1.bf16.xpose.msra.mxu0 0
        %578 = vmatprep.subr.bf16.mxu0 0
        %579 = vmatpush1.bf16.xpose.msra.mxu0 0
        %580 = vmatprep.subr.bf16.mxu0 0
        %581 = vmatpush1.bf16.xpose.msra.mxu0 0
        %582 = vmatprep.mubr.bf16.mxu0 0
        %583 = vmatmul.mubr.bf16.gmra.mrb[0].mxu0 %v536
        %v584 = vpop.f32.mrb[0].mxu0
        %v585 = vadd.f32 0.0, %v584
        %v586 = vpop.f32.mrb[0].mxu0
        %v587 = vpop.f32.mrb[0].mxu0
        %v588 = vpop.f32.mrb[0].mxu0
        %589 = vdwg.mxu0
        %591 = vrot.lane.b32.xlu0 %v585, 120
        %v592 = vpop.permute.xlu0 %591
        %v594 = vmax.f32 %v585, %v592
        %595 = vrot.lane.b32.xlu0 %v585, 112
        %v596 = vpop.permute.xlu0 %595
        %v598 = vmax.f32 %v594, %v596
        %599 = vrot.lane.b32.xlu0 %v585, 104
        %v600 = vpop.permute.xlu0 %599
        %v602 = vmax.f32 %v598, %v600
        %603 = vrot.lane.b32.xlu0 %v585, 96
        %v604 = vpop.permute.xlu0 %603
        %v606 = vmax.f32 %v602, %v604
        %607 = vrot.lane.b32.xlu0 %v585, 88
        %v608 = vpop.permute.xlu0 %607
        %v610 = vmax.f32 %v606, %v608
        %611 = vrot.lane.b32.xlu0 %v585, 80
        %v612 = vpop.permute.xlu0 %611
        %v614 = vmax.f32 %v610, %v612
        %615 = vrot.lane.b32.xlu0 %v585, 72
        %v616 = vpop.permute.xlu0 %615
        %v618 = vmax.f32 %v614, %v616
        %620 = vrot.lane.b32.xlu0 %v618, 8
        %v621 = vpop.permute.xlu0 %620
        %623 = vrot.lane.b32.xlu0 %v618, 16
        %v624 = vpop.permute.xlu0 %623
        %626 = vrot.lane.b32.xlu0 %v618, 24
        %v627 = vpop.permute.xlu0 %626
        %629 = vrot.lane.b32.xlu0 %v618, 32
        %v630 = vpop.permute.xlu0 %629
        %632 = vrot.lane.b32.xlu0 %v618, 40
        %v633 = vpop.permute.xlu0 %632
        %635 = vrot.lane.b32.xlu0 %v618, 48
        %v636 = vpop.permute.xlu0 %635
        %638 = vrot.lane.b32.xlu0 %v618, 56
        %v639 = vpop.permute.xlu0 %638
        %vm641 = vcmask 64512
        %v642 = vsel %vm641, %v618, %v621
        %vm643 = vcmask 130048
        %v644 = vsel %vm643, %v642, %v624
        %vm645 = vcmask 195584
        %v646 = vsel %vm645, %v644, %v627
        %vm647 = vcmask 261120
        %v648 = vsel %vm647, %v646, %v630
        %vm649 = vcmask 326656
        %v650 = vsel %vm649, %v648, %v633
        %vm651 = vcmask 392192
        %v652 = vsel %vm651, %v650, %v636
        %vm653 = vcmask 457728
        %v654 = vsel %vm653, %v652, %v639
        %v655 = vsub.f32 %v585, %v654
        %v656 = vmul.f32 %v655, 1.442695
        %v657 = vpow.pop %v656
        %659 = vrot.lane.b32.xlu0 %v657, 120
        %v660 = vpop.permute.xlu0 %659
        %v662 = vadd.f32 %v657, %v660
        %663 = vrot.lane.b32.xlu0 %v657, 112
        %v664 = vpop.permute.xlu0 %663
        %v666 = vadd.f32 %v662, %v664
        %667 = vrot.lane.b32.xlu0 %v657, 104
        %v668 = vpop.permute.xlu0 %667
        %v670 = vadd.f32 %v666, %v668
        %671 = vrot.lane.b32.xlu0 %v657, 96
        %v672 = vpop.permute.xlu0 %671
        %v674 = vadd.f32 %v670, %v672
        %675 = vrot.lane.b32.xlu0 %v657, 88
        %v676 = vpop.permute.xlu0 %675
        %v678 = vadd.f32 %v674, %v676
        %679 = vrot.lane.b32.xlu0 %v657, 80
        %v680 = vpop.permute.xlu0 %679
        %v682 = vadd.f32 %v678, %v680
        %683 = vrot.lane.b32.xlu0 %v657, 72
        %v684 = vpop.permute.xlu0 %683
        %v686 = vadd.f32 %v682, %v684
        %688 = vrot.lane.b32.xlu0 %v686, 8
        %v689 = vpop.permute.xlu0 %688
        %691 = vrot.lane.b32.xlu0 %v686, 16
        %v692 = vpop.permute.xlu0 %691
        %694 = vrot.lane.b32.xlu0 %v686, 24
        %v695 = vpop.permute.xlu0 %694
        %697 = vrot.lane.b32.xlu0 %v686, 32
        %v698 = vpop.permute.xlu0 %697
        %700 = vrot.lane.b32.xlu0 %v686, 40
        %v701 = vpop.permute.xlu0 %700
        %703 = vrot.lane.b32.xlu0 %v686, 48
        %v704 = vpop.permute.xlu0 %703
        %706 = vrot.lane.b32.xlu0 %v686, 56
        %v707 = vpop.permute.xlu0 %706
        %v709 = vsel %vm641, %v686, %v689
        %v710 = vsel %vm643, %v709, %v692
        %v711 = vsel %vm645, %v710, %v695
        %v712 = vsel %vm647, %v711, %v698
        %v713 = vsel %vm649, %v712, %v701
        %v714 = vsel %vm651, %v713, %v704
        %v715 = vsel %vm653, %v714, %v707
        %v716 = vrcp.pop %v715
        %v717 = vmul.f32 %v657, %v716
        %718 = vst.msk [vmem:[%s375] sm:$0xff] %vm427, %v717
        %v719 = vpack.c.bf16 %v468, %v468
        %v721 = vrot.slane %v719, 4
        %v724 = vsel %vm483, %v719, %v721
        %v730 = vmul.bf16 %v724, %v504
        %v731 = vmul.bf16 %v724, %v505
        %v732 = vmul.bf16 %v724, %v506
        %v733 = vmul.bf16 %v724, %v507
        %v734 = vpack.c.bf16 %v717, %v717
        %v736 = vsel %vm427, %v734, 0
        %738 = vmatprep.subr.bf16.mxu0 0
        %739 = vmatpush1.bf16.msra.mxu0 %v730
        %740 = vmatprep.subr.bf16.mxu0 0
        %741 = vmatpush1.bf16.msra.mxu0 %v731
        %742 = vmatprep.subr.bf16.mxu0 0
        %743 = vmatpush1.bf16.msra.mxu0 %v732
        %744 = vmatprep.subr.bf16.mxu0 0
        %745 = vmatpush1.bf16.msra.mxu0 %v733
        %746 = vmatprep.subr.bf16.mxu0 0
        %747 = vmatpush1.bf16.msra.mxu0 0
        %748 = vmatprep.subr.bf16.mxu0 0
        %749 = vmatpush1.bf16.msra.mxu0 0
        %750 = vmatprep.subr.bf16.mxu0 0
        %751 = vmatpush1.bf16.msra.mxu0 0
        %752 = vmatprep.subr.bf16.mxu0 0
        %753 = vmatpush1.bf16.msra.mxu0 0
        %754 = vmatprep.subr.bf16.mxu0 0
        %755 = vmatpush1.bf16.msra.mxu0 0
        %756 = vmatprep.subr.bf16.mxu0 0
        %757 = vmatpush1.bf16.msra.mxu0 0
        %758 = vmatprep.subr.bf16.mxu0 0
        %759 = vmatpush1.bf16.msra.mxu0 0
        %760 = vmatprep.subr.bf16.mxu0 0
        %761 = vmatpush1.bf16.msra.mxu0 0
        %762 = vmatprep.subr.bf16.mxu0 0
        %763 = vmatpush1.bf16.msra.mxu0 0
        %764 = vmatprep.subr.bf16.mxu0 0
        %765 = vmatpush1.bf16.msra.mxu0 0
        %766 = vmatprep.subr.bf16.mxu0 0
        %767 = vmatpush1.bf16.msra.mxu0 0
        %768 = vmatprep.subr.bf16.mxu0 0
        %769 = vmatpush1.bf16.msra.mxu0 0
        %770 = vmatprep.mubr.bf16.mxu0 0
        %771 = vmatmul.mubr.bf16.gmra.mrb[0].mxu0 %v736
        %v772 = vpop.f32.mrb[0].mxu0
        %v773 = vadd.f32 0.0, %v772
        %v774 = vpop.f32.mrb[0].mxu0
        %v775 = vpop.f32.mrb[0].mxu0
        %v776 = vpop.f32.mrb[0].mxu0
        %777 = vdwg.mxu0
        %v778 = vpack.c.bf16 %v773, %v773
        %v779 = vld [vmem:[#allocation7] sm:$0xf]
        %v780 = vld [vmem:[#allocation7 + $0x4] sm:$0xf]
        %v781 = vld [vmem:[#allocation7 + $0x8] sm:$0xf]
        %v782 = vld [vmem:[#allocation7 + $0xc] sm:$0xf]
        %v783 = vld [vmem:[#allocation7 + $0x10] sm:$0xf]
        %v784 = vld [vmem:[#allocation7 + $0x14] sm:$0xf]
        %v785 = vld [vmem:[#allocation7 + $0x18] sm:$0xf]
        %v786 = vld [vmem:[#allocation7 + $0x1c] sm:$0xf]
        %v787 = vld [vmem:[%s3] sm:$0x1]
        %v789 = vlaneseq
        %v790 = vshrl.u32 %v789, 7
        %v791 = vsub.s32 0, %v790
        %v792 = vrot.slane %v787, %v791
        %v802 = vunpack.c.l.b16 %v779
        %v803 = vunpack.c.l.b16 %v780
        %v804 = vunpack.c.l.b16 %v781
        %v805 = vunpack.c.l.b16 %v782
        %v806 = vunpack.c.l.b16 %v783
        %v807 = vunpack.c.l.b16 %v784
        %v808 = vunpack.c.l.b16 %v785
        %v809 = vunpack.c.l.b16 %v786
        %v810 = vpack.c.b16 %v803, %v802
        %v811 = vpack.c.b16 %v805, %v804
        %v812 = vpack.c.b16 %v807, %v806
        %v813 = vpack.c.b16 %v809, %v808
        %v819 = vsel %vm427, %v778, 0
        %821 = vmatprep.subr.bf16.mxu0 0
        %822 = vmatpush1.bf16.msra.mxu0 %v810
        %823 = vmatprep.subr.bf16.mxu0 0
        %824 = vmatpush1.bf16.msra.mxu0 %v811
        %825 = vmatprep.subr.bf16.mxu0 0
        %826 = vmatpush1.bf16.msra.mxu0 %v812
        %827 = vmatprep.subr.bf16.mxu0 0
        %828 = vmatpush1.bf16.msra.mxu0 %v813
        %829 = vmatprep.subr.bf16.mxu0 0
        %830 = vmatpush1.bf16.msra.mxu0 0
        %831 = vmatprep.subr.bf16.mxu0 0
        %832 = vmatpush1.bf16.msra.mxu0 0
        %833 = vmatprep.subr.bf16.mxu0 0
        %834 = vmatpush1.bf16.msra.mxu0 0
        %835 = vmatprep.subr.bf16.mxu0 0
        %836 = vmatpush1.bf16.msra.mxu0 0
        %837 = vmatprep.subr.bf16.mxu0 0
        %838 = vmatpush1.bf16.msra.mxu0 0
        %839 = vmatprep.subr.bf16.mxu0 0
        %840 = vmatpush1.bf16.msra.mxu0 0
        %841 = vmatprep.subr.bf16.mxu0 0
        %842 = vmatpush1.bf16.msra.mxu0 0
        %843 = vmatprep.subr.bf16.mxu0 0
        %844 = vmatpush1.bf16.msra.mxu0 0
        %845 = vmatprep.subr.bf16.mxu0 0
        %846 = vmatpush1.bf16.msra.mxu0 0
        %847 = vmatprep.subr.bf16.mxu0 0
        %848 = vmatpush1.bf16.msra.mxu0 0
        %849 = vmatprep.subr.bf16.mxu0 0
        %850 = vmatpush1.bf16.msra.mxu0 0
        %851 = vmatprep.subr.bf16.mxu0 0
        %852 = vmatpush1.bf16.msra.mxu0 0
        %853 = vmatprep.mubr.bf16.mxu0 0
        %854 = vmatmul.mubr.bf16.gmra.mrb[0].mxu0 %v819
        %v855 = vpop.f32.mrb[0].mxu0
        %v856 = vadd.f32 %v792, %v855
        %v857 = vpop.f32.mrb[0].mxu0
        %v858 = vpop.f32.mrb[0].mxu0
        %v859 = vpop.f32.mrb[0].mxu0
        %860 = vdwg.mxu0
        %v861 = vadd.f32 %v856, %v377
        %v862 = vsel %vm427, %v861, 0.0
        %863 = vadd.xlane.f32.xlu0 %v862
        %v864 = vpop.xlane.xlu0 %863
        %v865 = vrcp.pop 64.0
        %v866 = vmul.f32 %v864, %v865
        %v867 = vsub.f32 %v861, %v866
        %v868 = vmul.f32 %v867, %v867
        %v869 = vsel %vm427, %v868, 0.0
        %870 = vadd.xlane.f32.xlu0 %v869
        %v871 = vpop.xlane.xlu0 %870
        %v872 = vmul.f32 %v871, %v865
        %v873 = vadd.f32 %v872, 1e-05
        %v874 = vrsqrt.pop %v873
        %v875 = vmul.f32 %v867, %v874
        %v876 = vld [vmem:[%s4] sm:$0x1]
        %v878 = vlaneseq
        %v879 = vshrl.u32 %v878, 7
        %v880 = vsub.s32 0, %v879
        %v881 = vrot.slane %v876, %v880
        %v883 = vmul.f32 %v875, %v881
        %v884 = vld [vmem:[%s5] sm:$0x1]
        %v886 = vlaneseq
        %v887 = vshrl.u32 %v886, 7
        %v888 = vsub.s32 0, %v887
        %v889 = vrot.slane %v884, %v888
        %v891 = vadd.f32 %v883, %v889
        %892 = vst.msk [vmem:[%s368] sm:$0xff] %vm427, %v891
        %s893 = sand.u32 %s191, 1
        %s894 = scalar_lea.sflag [#allocation4], %s893
        %s895 = sand.u32 %s191, 1
        %s896 = smul.addr %s895, 8
        %s897 = scalar_lea.vmem [#allocation10], %s896
        %s898 = sand.u32 %s217, 1
        %s899 = scalar_lea.sflag [#allocation12], %s898
        %s900 = sand.u32 %s217, 1
        %s901 = smul.addr %s900, 8
        %s902 = scalar_lea.vmem [#allocation11], %s901
        // Predicated region
        $region65: #{tpu_custom_call.1} parent=47 // pred_check
          %p903 = pneg %p201
        $region66: #{tpu_custom_call.1} parent=47 // pred_check_branch
          %905 = sbr.rel (%p903) target = $region68
        $region67: #{tpu_custom_call.1} parent=47 // pred_region
          %s907 = ssub.s32 128, 128
          %908 = vsyncadd %s894, %s907
          %s909 = smul.addr %s31, 128
          %s910 = scalar_lea.hbm %s7, %s909
          %s912 = sshll.u32 %s897, 4
          %s913 = int_to_ptr.vmem [resolvable:$true] %s912
          %915 = dma.vmem_to_hbm [thread:$0]  %s913, 128, %s910, %s894
        $region68: #{tpu_custom_call.1} parent=47 // pred_fallthru
          _
        // Predicated region
        $region69: #{tpu_custom_call.1} parent=47 // pred_check
          %p916 = pneg %p227
        $region70: #{tpu_custom_call.1} parent=47 // pred_check_branch
          %918 = sbr.rel (%p916) target = $region72
        $region71: #{tpu_custom_call.1} parent=47 // pred_region
          %s920 = ssub.s32 128, 128
          %921 = vsyncadd %s899, %s920
          %s922 = smul.addr %s31, 128
          %s923 = scalar_lea.hbm %s8, %s922
          %s925 = sshll.u32 %s902, 4
          %s926 = int_to_ptr.vmem [resolvable:$true] %s925
          %928 = dma.vmem_to_hbm [thread:$0]  %s926, 128, %s923, %s899
        $region72: #{tpu_custom_call.1} parent=47 // pred_fallthru
          _
      $region48: #{tpu_custom_call.1} parent=5 // pred_fallthru
        _
      %p929 = scmp.le.s32.totalorder 2, %s26
      // Predicated region
      $region73: #{tpu_custom_call.1} parent=5 // pred_check
        %p930 = pneg %p929
      $region74: #{tpu_custom_call.1} parent=5 // pred_check_branch
        %932 = sbr.rel (%p930) target = $region76
      $region75: #{tpu_custom_call.1} parent=5 // pred_region
        %s933 = ssub.s32 %s26, 2
        // Predicated region
        $region77: #{tpu_custom_call.1} parent=75 // pred_check
          %p934 = pneg %p207
        $region78: #{tpu_custom_call.1} parent=75 // pred_check_branch
          %936 = sbr.rel (%p934) target = $region80
        $region79: #{tpu_custom_call.1} parent=75 // pred_region
          %s937 = sand.u32 %s192, 1
          %s938 = scalar_lea.sflag [#allocation4], %s937
          %s939 = sand.u32 %s192, 1
          %s940 = smul.addr %s939, 8
          %s941 = scalar_lea.vmem [#allocation10], %s940
          %942 = dma.done %s938, 128
        $region80: #{tpu_custom_call.1} parent=75 // pred_fallthru
          _
        // Predicated region
        $region81: #{tpu_custom_call.1} parent=75 // pred_check
          %p943 = pneg %p233
        $region82: #{tpu_custom_call.1} parent=75 // pred_check_branch
          %945 = sbr.rel (%p943) target = $region84
        $region83: #{tpu_custom_call.1} parent=75 // pred_region
          %s946 = sand.u32 %s218, 1
          %s947 = scalar_lea.sflag [#allocation12], %s946
          %s948 = sand.u32 %s218, 1
          %s949 = smul.addr %s948, 8
          %s950 = scalar_lea.vmem [#allocation11], %s949
          %951 = dma.done %s947, 128
        $region84: #{tpu_custom_call.1} parent=75 // pred_fallthru
          _
      $region76: #{tpu_custom_call.1} parent=5 // pred_fallthru
        _
    $region6: #{tpu_custom_call.1} parent=1 // loop_footer
      %s30 = sadd.s32 1, %s26
    $region7: #{tpu_custom_call.1} parent=1 // loop_footer_branch
      %25 = sbr.rel target = $region3
    $region8: #{tpu_custom_call.1} parent=1 // loop_exit
      _
    %952 = vsyncpa [#allocation3], 1
    %s953 = scalar_lea.sflag [#allocation3], 1
    %954 = vsyncpa %s953, 1
    %955 = vsyncpa [#allocation6], 1
    %956 = vsyncpa [#allocation9], 1
    %957 = vsyncpa [#allocation4], 1
    %s958 = scalar_lea.sflag [#allocation4], 1
    %959 = vsyncpa %s958, 1
    %960 = vsyncpa [#allocation12], 1
    %s961 = scalar_lea.sflag [#allocation12], 1
    %962 = vsyncpa %s961, 1

</llo_original>
